<compile_context>
chip_gen: v5e
topology: v5e:2x2
jax: 0.10.0
libtpu: 0.0.40
codegen_flags: <defaults>
</compile_context>

<pallas_src>
import functools

import jax
import jax.numpy as jnp
from jax import lax
from jax.experimental import pallas as pl
from jax.experimental.pallas import tpu as pltpu


# ----------------------------------------------------------------------------
# Kernels
# ----------------------------------------------------------------------------
def _varf_main_kernel(x_ref, z_ref, std_ref, shift_ref, s1_ref, s2_ref, *, B, TB):
    b = pl.program_id(1)                               # inner (batch) grid axis
    x = x_ref[...]                                     # (TB, TF), input dtype
    z_ref[...] = x                                     # lane-dense streaming copy
    x32 = x.astype(jnp.float32)

    @pl.when(b == 0)
    def _():
        # Per-column shift (global row 0): shifted moments are immune to the
        # E[x^2]-E[x]^2 cancellation when |mean| >> std.
        shift_ref[...] = x32[0:1, :]
        s1_ref[...] = jnp.zeros_like(s1_ref)
        s2_ref[...] = jnp.zeros_like(s2_ref)

    d = x32 - shift_ref[...]
    if B % TB != 0:
        # Partial last batch tile: mask padding rows.  Keep this a select —
        # never a multiply-by-mask — so garbage/NaN padding cannot propagate.
        row = lax.broadcasted_iota(jnp.int32, (TB, 1), 0) + b * TB
        d = jnp.where(row < B, d, 0.0)
    s1_ref[...] += jnp.sum(d, axis=0, keepdims=True)
    s2_ref[...] += jnp.sum(d * d, axis=0, keepdims=True)

    @pl.when(b == pl.num_programs(1) - 1)
    def _():
        s1 = s1_ref[...]
        s2 = s2_ref[...]
        # Unbiased variance (div by B-1).  B == 1 -> 0/0 -> NaN, matching torch.
        var = (s2 - s1 * s1 * jnp.float32(1.0 / B)) / jnp.float32(B - 1)
        # Lanes beyond F in the last (partial) feature tile hold garbage; the
        # (1, F) output extent masks them on writeback.
        std_ref[...] = jnp.sqrt(jnp.maximum(var, 0.0))


def _varf_col_kernel(mean_ref, zin_ref, zout_ref, *, F, col0):
    # Rewrite the 128-lane slab containing global column F: column F gets the
    # broadcast mean(std); every other lane is passed through unchanged (the
    # output buffer is aliased to the input buffer).
    col = lax.broadcasted_iota(jnp.int32, zin_ref.shape, 1) + col0
    fill = mean_ref[0, 0].astype(zout_ref.dtype)
    zout_ref[...] = jnp.where(col == F, fill, zin_ref[...])


# ----------------------------------------------------------------------------
# Tile selection (generation-aware)
# ----------------------------------------------------------------------------
def _round_up(x, m):
    return ((x + m - 1) // m) * m


def _vmem_budget_bytes():
    # Leave ~25% headroom: ~48 MiB on v7x (64 MiB physical), ~96 MiB on
    # v5e/v6e (128 MiB physical).  Conservative fallback if the query fails.
    cap = 64 * 1024 * 1024
    try:
        info_cap = int(pltpu.get_tpu_info().vmem_capacity_bytes)
        if info_cap > 0:
            cap = info_cap
    except Exception:
        pass
    return (cap * 3) // 4


def _choose_tiles(B, F, itemsize, budget, block_rows, block_cols):
    bpr = 2 * itemsize                 # bytes per (row, lane): x read + z write
    lanes_f = _round_up(F, 128)

    # Batch tile: keep the full batch per block unless that would overflow the
    # double-buffered in+out budget (or push blocks far past the sweet spot).
    if block_rows is not None:
        TB = min(B, int(block_rows))
    else:
        max_rows = min(8192, max(8, budget // (2 * 128 * bpr)))
        TB = B if B <= max_rows else min(4096, (max_rows // 8) * 8)
    if TB < B:
        TB = max(8, (TB // 8) * 8)     # partial-B tiles must be sublane aligned

    # Feature tile: multiple of 128 lanes, ~2 MiB blocks, capped by the budget.
    if block_cols is not None:
        TF = _round_up(max(1, int(block_cols)), 128)
    else:
        TF = max(128, ((2 * 1024 * 1024) // (TB * itemsize)) // 128 * 128)
    tf_cap = max(128, (budget // (2 * TB * bpr)) // 128 * 128)
    TF = min(TF, tf_cap, lanes_f)
    return int(TB), int(TF)


# ----------------------------------------------------------------------------
# Wrapper
# ----------------------------------------------------------------------------
@functools.partial(jax.jit, static_argnames=("block_rows", "block_cols"))
def varf(x, *, block_rows=None, block_cols=None):
    assert x.ndim == 2, "Varf expects a (batch, features) input"
    B, F = x.shape
    itemsize = jnp.dtype(x.dtype).itemsize
    budget = _vmem_budget_bytes()
    TB, TF = _choose_tiles(B, F, itemsize, budget, block_rows, block_cols)
    n_b = pl.cdiv(B, TB)
    n_f = pl.cdiv(F, TF)

    main_kernel = functools.partial(_varf_main_kernel, B=B, TB=TB)
    z_main, stds = pl.pallas_call(
        main_kernel,
        out_shape=(jax.ShapeDtypeStruct((B, F + 1), x.dtype),
                   jax.ShapeDtypeStruct((1, F), jnp.float32)),
        grid=(n_f, n_b),
        in_specs=[pl.BlockSpec((TB, TF), lambda f, b: (b, f))],
        out_specs=(pl.BlockSpec((TB, TF), lambda f, b: (b, f)),
                   pl.BlockSpec((1, TF), lambda f, b: (0, f))),
        scratch_shapes=[pltpu.VMEM((1, TF), jnp.float32),   # shift (row 0)
                        pltpu.VMEM((1, TF), jnp.float32),   # sum(d)
                        pltpu.VMEM((1, TF), jnp.float32)],  # sum(d*d)
        compiler_params=pltpu.CompilerParams(
            dimension_semantics=("parallel", "arbitrary"),
            vmem_limit_bytes=int(budget)),
        cost_estimate=pl.CostEstimate(
            flops=6 * B * F,
            transcendentals=F,
            bytes_accessed=B * F * itemsize + B * (F + 1) * itemsize + 4 * F),
    )(x)

    # Pairwise-summed mean over per-column stds (matches the reference numerics).
    col_mean = jnp.mean(stds).reshape(1, 1)

    # Tiny aliased epilogue: only the 128-lane slab containing column F is
    # re-read/re-written in place; the rest of z is untouched (aliased buffer).
    cb = F // 128
    col_kernel = functools.partial(_varf_col_kernel, F=F, col0=cb * 128)
    z = pl.pallas_call(
        col_kernel,
        out_shape=jax.ShapeDtypeStruct((B, F + 1), x.dtype),
        grid=(n_b,),
        in_specs=[pl.BlockSpec(memory_space=pltpu.MemorySpace.SMEM),
                  pl.BlockSpec((TB, 128), lambda b: (b, cb))],
        out_specs=pl.BlockSpec((TB, 128), lambda b: (b, cb)),
        input_output_aliases={1: 0},
        compiler_params=pltpu.CompilerParams(
            dimension_semantics=("parallel",)),
    )(col_mean, z_main)
    return z


def varf_ref(x):
    # Pure-JAX reference mirroring the PyTorch module.
    B = x.shape[0]
    std = jnp.std(x, axis=0, keepdims=True, ddof=1)     # (1, F)
    y = jnp.mean(std, axis=1, keepdims=True)            # (1, 1)
    y = jnp.broadcast_to(y, (B, 1)).astype(x.dtype)     # (B, 1)
    return jnp.concatenate([x, y], axis=1)              # (B, F+1)


if __name__ == "__main__":
    key = jax.random.PRNGKey(0)
    # Small, layout-representative cases:
    #   (8, 512)   auto tiles; F % 128 == 0 -> column F lives in an output block
    #              the main kernel never touches (epilogue-only write)
    #   (16, 384)  forced TF=256 -> partial last feature tile
    #   (4, 32)    single sub-128-wide tile, block wider than the array
    #   (20, 200)  forced TB=8, TF=128 -> B-tiling with a partial batch tile
    cases = [
        (8, 512, None, None),
        (16, 384, None, 256),
        (4, 32, None, None),
        (20, 200, 8, 128),
    ]
    for (B, F, br, bc) in cases:
        key, sub = jax.random.split(key)
        # Non-zero mean to exercise the shifted-moment numerics.
        x = jax.random.normal(sub, (B, F), dtype=jnp.float32) * 3.0 + 5.0

        z = varf(x, block_rows=br, block_cols=bc)
        jax.block_until_ready(z)

        z_ref = varf_ref(x)
        assert z.shape == (B, F + 1), (z.shape, (B, F + 1))
        err = float(jnp.max(jnp.abs(z - z_ref)))
        assert jnp.allclose(z, z_ref, atol=1e-4, rtol=1e-4), (B, F, br, bc, err)
    print("KERNEL_OK")
</pallas_src>

<mosaic_0001>
module attributes {stable_mosaic.version = 11 : i64} {
  func.func @_varf_col_kernel(%arg0: i32, %arg1: memref<1x1xf32, #tpu.memory_space<smem>>, %arg2: memref<8x128xf32, #tpu.memory_space<vmem>>, %arg3: memref<8x128xf32, #tpu.memory_space<vmem>>) attributes {dimension_semantics = [#tpu.dimension_semantics<parallel>], iteration_bounds = array<i64: 1>, scalar_prefetch = 0 : i64, scratch_operands = 0 : i64, tpu.core_type = #tpu.core_type<tc>, window_params = [{transform_indices = @transform_0, window_bounds = array<i64: 1, 1>}, {transform_indices = @transform_1, window_bounds = array<i64: 8, 128>}, {transform_indices = @transform_2, window_bounds = array<i64: 8, 128>}]} {
    %0 = tpu.iota {dimensions = array<i32: 1>} : vector<8x128xi32>
    %c512_i32 = arith.constant 512 : i32
    %1 = vector.broadcast %c512_i32 : i32 to vector<8x128xi32>
    %2 = arith.addi %0, %1 : vector<8x128xi32>
    %c0 = arith.constant 0 : index
    %c0_0 = arith.constant 0 : index
    %3 = memref.load %arg1[%c0, %c0_0] : memref<1x1xf32, #tpu.memory_space<smem>>
    %c512_i32_1 = arith.constant 512 : i32
    %4 = vector.broadcast %c512_i32_1 : i32 to vector<8x128xi32>
    %5 = arith.cmpi eq, %2, %4 : vector<8x128xi32>
    %c0_2 = arith.constant 0 : index
    %c0_3 = arith.constant 0 : index
    %6 = vector.load %arg2[%c0_2, %c0_3] : memref<8x128xf32, #tpu.memory_space<vmem>>, vector<8x128xf32>
    %7 = vector.broadcast %3 : f32 to vector<8x128xf32>
    %8 = arith.select %5, %7, %6 : vector<8x128xi1>, vector<8x128xf32>
    %c0_4 = arith.constant 0 : index
    %c0_5 = arith.constant 0 : index
    %9 = vector.load %arg3[%c0_4, %c0_5] : memref<8x128xf32, #tpu.memory_space<vmem>>, vector<8x128xf32>
    tpu.vector_store %arg3[%c0_4, %c0_5], %8 {strides = array<i32>} : memref<8x128xf32, #tpu.memory_space<vmem>>, vector<8x128xf32>,
    return
  }
  func.func @transform_0(%arg0: i32) -> (i32, i32) {
    %c0_i32 = arith.constant 0 : i32
    %c0_i32_0 = arith.constant 0 : i32
    %c0_i32_1 = arith.constant 0 : i32
    return %c0_i32, %c0_i32_0 : i32, i32
  }
  func.func @transform_1(%arg0: i32) -> (i32, i32) {
    %c4_i32 = arith.constant 4 : i32
    %c0_i32 = arith.constant 0 : i32
    return %arg0, %c4_i32 : i32, i32
  }
  func.func @transform_2(%arg0: i32) -> (i32, i32) {
    %c4_i32 = arith.constant 4 : i32
    %c0_i32 = arith.constant 0 : i32
    return %arg0, %c4_i32 : i32, i32
  }
}

module attributes {stable_mosaic.version = 11 : i64} {
  func.func @_varf_main_kernel(%arg0: i32, %arg1: i32, %arg2: memref<8x512xf32, #tpu.memory_space<vmem>>, %arg3: memref<8x512xf32, #tpu.memory_space<vmem>>, %arg4: memref<1x512xf32, #tpu.memory_space<vmem>>, %arg5: memref<1x512xf32, #tpu.memory_space<vmem>>, %arg6: memref<1x512xf32, #tpu.memory_space<vmem>>, %arg7: memref<1x512xf32, #tpu.memory_space<vmem>>) attributes {dimension_semantics = [#tpu.dimension_semantics<parallel>, #tpu.dimension_semantics<arbitrary>], iteration_bounds = array<i64: 1, 1>, scalar_prefetch = 0 : i64, scratch_operands = 3 : i64, tpu.core_type = #tpu.core_type<tc>, window_params = [{transform_indices = @transform_0, window_bounds = array<i64: 8, 512>}, {transform_indices = @transform_1, window_bounds = array<i64: 8, 512>}, {transform_indices = @transform_2, window_bounds = array<i64: 1, 512>}]} {
    %c0 = arith.constant 0 : index
    %c0_0 = arith.constant 0 : index
    %0 = vector.load %arg2[%c0, %c0_0] : memref<8x512xf32, #tpu.memory_space<vmem>>, vector<8x512xf32>
    %c0_1 = arith.constant 0 : index
    %c0_2 = arith.constant 0 : index
    %1 = vector.load %arg3[%c0_1, %c0_2] : memref<8x512xf32, #tpu.memory_space<vmem>>, vector<8x512xf32>
    tpu.vector_store %arg3[%c0_1, %c0_2], %0 {strides = array<i32>} : memref<8x512xf32, #tpu.memory_space<vmem>>, vector<8x512xf32>,
    %c0_i32 = arith.constant 0 : i32
    %2 = arith.cmpi eq, %arg1, %c0_i32 : i32
    %3 = arith.extui %2 : i1 to i32
    %c0_i32_3 = arith.constant 0 : i32
    %4 = arith.cmpi ne, %3, %c0_i32_3 : i32
    scf.if %4 {
      %22 = vector.extract_strided_slice %0 {offsets = [0, 0], sizes = [1, 512], strides = [1, 1]} : vector<8x512xf32> to vector<1x512xf32>
      %c0_17 = arith.constant 0 : index
      %c0_18 = arith.constant 0 : index
      %23 = vector.load %arg5[%c0_17, %c0_18] : memref<1x512xf32, #tpu.memory_space<vmem>>, vector<1x512xf32>
      tpu.vector_store %arg5[%c0_17, %c0_18], %22 {strides = array<i32>} : memref<1x512xf32, #tpu.memory_space<vmem>>, vector<1x512xf32>,
      %cst_19 = arith.constant 0.000000e+00 : f32
      %24 = vector.broadcast %cst_19 : f32 to vector<1x512xf32>
      %c0_20 = arith.constant 0 : index
      %c0_21 = arith.constant 0 : index
      %25 = vector.load %arg6[%c0_20, %c0_21] : memref<1x512xf32, #tpu.memory_space<vmem>>, vector<1x512xf32>
      tpu.vector_store %arg6[%c0_20, %c0_21], %24 {strides = array<i32>} : memref<1x512xf32, #tpu.memory_space<vmem>>, vector<1x512xf32>,
      %cst_22 = arith.constant 0.000000e+00 : f32
      %26 = vector.broadcast %cst_22 : f32 to vector<1x512xf32>
      %c0_23 = arith.constant 0 : index
      %c0_24 = arith.constant 0 : index
      %27 = vector.load %arg7[%c0_23, %c0_24] : memref<1x512xf32, #tpu.memory_space<vmem>>, vector<1x512xf32>
      tpu.vector_store %arg7[%c0_23, %c0_24], %26 {strides = array<i32>} : memref<1x512xf32, #tpu.memory_space<vmem>>, vector<1x512xf32>,
    } else {
    }
    %c0_4 = arith.constant 0 : index
    %c0_5 = arith.constant 0 : index
    %5 = vector.load %arg5[%c0_4, %c0_5] : memref<1x512xf32, #tpu.memory_space<vmem>>, vector<1x512xf32>
    %6 = vector.broadcast %5 : vector<1x512xf32> to vector<8x512xf32>
    %7 = arith.subf %0, %6 : vector<8x512xf32>
    %c0_6 = arith.constant 0 : index
    %c0_7 = arith.constant 0 : index
    %8 = vector.load %arg6[%c0_6, %c0_7] : memref<1x512xf32, #tpu.memory_space<vmem>>, vector<1x512xf32>
    %cst = arith.constant dense<0.000000e+00> : vector<512xf32>
    %9 = vector.multi_reduction <add>, %7, %cst [0] : vector<8x512xf32> to vector<512xf32>
    %10 = vector.shape_cast %9 : vector<512xf32> to vector<1x512xf32>
    %11 = arith.addf %8, %10 : vector<1x512xf32>
    %c0_8 = arith.constant 0 : index
    %c0_9 = arith.constant 0 : index
    %12 = vector.load %arg6[%c0_8, %c0_9] : memref<1x512xf32, #tpu.memory_space<vmem>>, vector<1x512xf32>
    tpu.vector_store %arg6[%c0_8, %c0_9], %11 {strides = array<i32>} : memref<1x512xf32, #tpu.memory_space<vmem>>, vector<1x512xf32>,
    %c0_10 = arith.constant 0 : index
    %c0_11 = arith.constant 0 : index
    %13 = vector.load %arg7[%c0_10, %c0_11] : memref<1x512xf32, #tpu.memory_space<vmem>>, vector<1x512xf32>
    %14 = arith.mulf %7, %7 : vector<8x512xf32>
    %cst_12 = arith.constant dense<0.000000e+00> : vector<512xf32>
    %15 = vector.multi_reduction <add>, %14, %cst_12 [0] : vector<8x512xf32> to vector<512xf32>
    %16 = vector.shape_cast %15 : vector<512xf32> to vector<1x512xf32>
    %17 = arith.addf %13, %16 : vector<1x512xf32>
    %c0_13 = arith.constant 0 : index
    %c0_14 = arith.constant 0 : index
    %18 = vector.load %arg7[%c0_13, %c0_14] : memref<1x512xf32, #tpu.memory_space<vmem>>, vector<1x512xf32>
    tpu.vector_store %arg7[%c0_13, %c0_14], %17 {strides = array<i32>} : memref<1x512xf32, #tpu.memory_space<vmem>>, vector<1x512xf32>,
    %c0_i32_15 = arith.constant 0 : i32
    %19 = arith.cmpi eq, %arg1, %c0_i32_15 : i32
    %20 = arith.extui %19 : i1 to i32
    %c0_i32_16 = arith.constant 0 : i32
    %21 = arith.cmpi ne, %20, %c0_i32_16 : i32
    scf.if %21 {
      %c0_17 = arith.constant 0 : index
      %c0_18 = arith.constant 0 : index
      %22 = vector.load %arg6[%c0_17, %c0_18] : memref<1x512xf32, #tpu.memory_space<vmem>>, vector<1x512xf32>
      %c0_19 = arith.constant 0 : index
      %c0_20 = arith.constant 0 : index
      %23 = vector.load %arg7[%c0_19, %c0_20] : memref<1x512xf32, #tpu.memory_space<vmem>>, vector<1x512xf32>
      %24 = arith.mulf %22, %22 : vector<1x512xf32>
      %cst_21 = arith.constant 1.250000e-01 : f32
      %25 = vector.broadcast %cst_21 : f32 to vector<1x512xf32>
      %26 = arith.mulf %24, %25 : vector<1x512xf32>
      %27 = arith.subf %23, %26 : vector<1x512xf32>
      %cst_22 = arith.constant 7.000000e+00 : f32
      %28 = vector.broadcast %cst_22 : f32 to vector<1x512xf32>
      %29 = arith.divf %27, %28 : vector<1x512xf32>
      %cst_23 = arith.constant 0.000000e+00 : f32
      %30 = vector.broadcast %cst_23 : f32 to vector<1x512xf32>
      %31 = arith.maximumf %29, %30 : vector<1x512xf32>
      %32 = math.sqrt %31 : vector<1x512xf32>
      %c0_24 = arith.constant 0 : index
      %c0_25 = arith.constant 0 : index
      %33 = vector.load %arg4[%c0_24, %c0_25] : memref<1x512xf32, #tpu.memory_space<vmem>>, vector<1x512xf32>
      tpu.vector_store %arg4[%c0_24, %c0_25], %32 {strides = array<i32>} : memref<1x512xf32, #tpu.memory_space<vmem>>, vector<1x512xf32>,
    } else {
    }
    return
  }
  func.func @transform_0(%arg0: i32, %arg1: i32) -> (i32, i32) {
    %c0_i32 = arith.constant 0 : i32
    return %arg1, %arg0 : i32, i32
  }
  func.func @transform_1(%arg0: i32, %arg1: i32) -> (i32, i32) {
    %c0_i32 = arith.constant 0 : i32
    return %arg1, %arg0 : i32, i32
  }
  func.func @transform_2(%arg0: i32, %arg1: i32) -> (i32, i32) {
    %c0_i32 = arith.constant 0 : i32
    %c0_i32_0 = arith.constant 0 : i32
    return %c0_i32, %arg0 : i32, i32
  }
}

</mosaic_0001>

<llo_original>
// kernel: varf.3
$region0: #{varf.3}
  #allocation0 [shape = 'u32[]', space=smem, size = 0x4, offset = 0x4, fixed_abs, tag = 'smem constant byte address 0x4 - core index']
  #allocation1 [shape = 'u32[72,128]{1,0:T(1,128)}', space=vmem, size = 0x9000, scoped, tag = 'internal scratch']
  #allocation2 [shape = 'f32[1,1]{1,0:T(1,128)S(6)}', space=smem, size = 0x200, scoped, tag = 'scoped memory for varf.3']
  %s0 = inlined_call_operand.<no memory space> [shape: f32[1,1], index: 0, kind: input, shape index: {}]
  %s1 = inlined_call_operand.hbm [shape: f32[8,513], index: 1, kind: input, shape index: {}, may-alias: {1,2}]
  %s2 = inlined_call_operand.hbm [shape: f32[8,513], index: 2, kind: output, shape index: {}, may-alias: {1,2}]
  %s3 = sld [smem:[#allocation0]]
  $region22: #{varf.3} parent=0
    _
  %s5 = ssub.s32 1, %s3
  %s6 = scalar_select 0, %s5, %s3
  %7 = sst [smem:[#allocation2]] %s0
  $region1: #{varf.3} parent=0
    #allocation3 [shape = 'u8[4096]{0}', space=vmem, size = 0x1000, scoped, tag = 'input window, operand 1, single buffered']
    #allocation4 [shape = 's32[1]{0}', space=sflag, size = 0x4, scoped, tag = 'scoped memory for varf.3']
    #allocation5 [shape = 's32[1]{0}', space=sflag, size = 0x4, scoped, tag = 'scoped memory for varf.3']
    #allocation6 [shape = 'u8[4096]{0}', space=vmem, size = 0x1000, scoped, tag = 'output window, operand 0, single buffered']
    %8 = vsyncpa [#allocation4], 0
    %9 = vsyncpa [#allocation5], 0
    // Predicated region
    $region2: #{varf.3} parent=1 // pred_check
      _
    $region3: #{varf.3} parent=1 // pred_check_branch
      %11 = sbr.rel (0) target = $region5
    $region4: #{varf.3} parent=1 // pred_region
      _
    $region5: #{varf.3} parent=1 // pred_fallthru
      _
    // Predicated region
    $region6: #{varf.3} parent=1 // pred_check
      _
    $region7: #{varf.3} parent=1 // pred_check_branch
      %13 = sbr.rel (0) target = $region9
    $region8: #{varf.3} parent=1 // pred_region
      %15 = vsyncadd [#allocation4], 0
      %s16 = scalar_lea.hbm %s1, 32
      %s18 = sshll.u32 %s16, 4
      %s19 = int_to_ptr.hbm [resolvable:$true] %s18
      %s20 = sshll.u32 [#allocation3], 4
      %s21 = int_to_ptr.vmem [resolvable:$true] %s20
      %23 = dma.hbm_to_vmem [thread:$0]  %s19, 128, %s21, [#allocation4]
    $region9: #{varf.3} parent=1 // pred_fallthru
      _
    // Predicated region
    $region10: #{varf.3} parent=1 // pred_check
      _
    $region11: #{varf.3} parent=1 // pred_check_branch
      %25 = sbr.rel (0) target = $region13
    $region12: #{varf.3} parent=1 // pred_region
      %27 = dma.done [#allocation4], 128
    $region13: #{varf.3} parent=1 // pred_fallthru
      _
    %v28 = vlaneseq
    %v29 = vand.u32 %v28, 127
    %v30 = vadd.s32 %v29, 512
    %s31 = sld [smem:[#allocation2]]
    %vm32 = vcmp.eq.s32.totalorder %v30, 512
    %v33 = vld [vmem:[#allocation3] sm:$0xff]
    %v34 = vstv %s31
    %v35 = vsel %vm32, %v34, %v33
    %36 = vst [vmem:[#allocation6] sm:$0xff] %v35
    // Predicated region
    $region14: #{varf.3} parent=1 // pred_check
      _
    $region15: #{varf.3} parent=1 // pred_check_branch
      %38 = sbr.rel (0) target = $region17
    $region16: #{varf.3} parent=1 // pred_region
      %40 = vsyncadd [#allocation5], 0
      %s41 = scalar_lea.hbm %s2, 32
      %s43 = sshll.u32 [#allocation6], 4
      %s44 = int_to_ptr.vmem [resolvable:$true] %s43
      %s45 = sshll.u32 %s41, 4
      %s46 = int_to_ptr.hbm [resolvable:$true] %s45
      %48 = dma.vmem_to_hbm [thread:$0]  %s44, 128, %s46, [#allocation5]
    $region17: #{varf.3} parent=1 // pred_fallthru
      _
    // Predicated region
    $region18: #{varf.3} parent=1 // pred_check
      _
    $region19: #{varf.3} parent=1 // pred_check_branch
      %50 = sbr.rel (0) target = $region21
    $region20: #{varf.3} parent=1 // pred_region
      %52 = dma.done [#allocation5], 128
    $region21: #{varf.3} parent=1 // pred_fallthru
      _
    %53 = vsyncpa [#allocation4], 1
    %54 = vsyncpa [#allocation5], 1

// kernel: varf.2
$region0: #{varf.2}
  #allocation0 [shape = 'u32[]', space=smem, size = 0x4, offset = 0x4, fixed_abs, tag = 'smem constant byte address 0x4 - core index']
  #allocation1 [shape = 'u32[72,128]{1,0:T(1,128)}', space=vmem, size = 0x9000, scoped, tag = 'internal scratch']
  #allocation2 [shape = 'f32[1,512]{1,0:T(1,128)}', space=vmem, size = 0x800, scoped, tag = 'scratch operand']
  #allocation3 [shape = 'f32[1,512]{1,0:T(1,128)}', space=vmem, size = 0x800, scoped, tag = 'scratch operand']
  #allocation4 [shape = 'f32[1,512]{1,0:T(1,128)}', space=vmem, size = 0x800, scoped, tag = 'scratch operand']
  %s0 = inlined_call_operand.hbm [shape: f32[8,512], index: 0, kind: input, shape index: {}]
  %s1 = inlined_call_operand.hbm [shape: f32[8,513], index: 1, kind: output, shape index: {0}]
  %s2 = inlined_call_operand.vmem [shape: f32[1,512], index: 2, kind: output, shape index: {1}]
  %3 = xla_tuple %s1, %s2
  %s4 = sld [smem:[#allocation0]]
  $region34: #{varf.2} parent=0
    _
  %s6 = ssub.s32 1, %s4
  %s7 = scalar_select 0, %s6, %s4
  $region1: #{varf.2} parent=0
    #allocation5 [shape = 'u8[16384]{0}', space=vmem, size = 0x4000, scoped, tag = 'input window, operand 0, single buffered']
    #allocation6 [shape = 's32[1]{0}', space=sflag, size = 0x4, scoped, tag = 'scoped memory for varf.2']
    #allocation7 [shape = 's32[1]{0}', space=sflag, size = 0x4, scoped, tag = 'scoped memory for varf.2']
    #allocation8 [shape = 'u8[16384]{0}', space=vmem, size = 0x4000, scoped, tag = 'output window, operand 0, single buffered']
    %8 = vsyncpa [#allocation6], 0
    %9 = vsyncpa [#allocation7], 0
    // Predicated region
    $region2: #{varf.2} parent=1 // pred_check
      _
    $region3: #{varf.2} parent=1 // pred_check_branch
      %11 = sbr.rel (0) target = $region5
    $region4: #{varf.2} parent=1 // pred_region
      %13 = vsyncadd [#allocation6], 0
      %s15 = sshll.u32 %s0, 4
      %s16 = int_to_ptr.hbm [resolvable:$true] %s15
      %s17 = sshll.u32 [#allocation5], 4
      %s18 = int_to_ptr.vmem [resolvable:$true] %s17
      %20 = dma.hbm_to_vmem [thread:$0]  %s16, 512, %s18, [#allocation6]
    $region5: #{varf.2} parent=1 // pred_fallthru
      _
    // Predicated region
    $region6: #{varf.2} parent=1 // pred_check
      _
    $region7: #{varf.2} parent=1 // pred_check_branch
      %22 = sbr.rel (0) target = $region9
    $region8: #{varf.2} parent=1 // pred_region
      %24 = dma.done [#allocation6], 512
    $region9: #{varf.2} parent=1 // pred_fallthru
      _
    %v25 = vld [vmem:[#allocation5] sm:$0xff]
    %v26 = vld [vmem:[#allocation5 + $0x8] sm:$0xff]
    %v27 = vld [vmem:[#allocation5 + $0x10] sm:$0xff]
    %v28 = vld [vmem:[#allocation5 + $0x18] sm:$0xff]
    %29 = vst [vmem:[#allocation8] sm:$0xff] %v25
    %30 = vst [vmem:[#allocation8 + $0x8] sm:$0xff] %v26
    %31 = vst [vmem:[#allocation8 + $0x10] sm:$0xff] %v27
    %32 = vst [vmem:[#allocation8 + $0x18] sm:$0xff] %v28
    %p33 = scmp.eq.s32.totalorder 0, 0
    // Predicated region
    $region10: #{varf.2} parent=1 // pred_check
      %p34 = pneg %p33
    $region11: #{varf.2} parent=1 // pred_check_branch
      %36 = sbr.rel (%p34) target = $region13
    $region12: #{varf.2} parent=1 // pred_region
      %v41 = vrot.slane %v26, 7
      %v42 = vrot.slane %v27, 6
      %v43 = vrot.slane %v28, 5
      %vm44 = vcmask 1040384
      %v45 = vsel %vm44, %v25, %v41
      %vm46 = vcmask 1042434
      %v47 = vsel %vm46, %v42, %v43
      %vm48 = vcmask 1041408
      %v49 = vsel %vm48, %v45, %v47
      %v51 = vlaneseq
      %vm52 = vcmp.ge.s32.totalorder %v51, 0
      %vm53 = vcmp.lt.s32.totalorder %v51, 512
      %vm54 = vmand %vm52, %vm53
      %55 = vst.msk [vmem:[#allocation2] sm:$0xf] %vm54, %v49
      %56 = vst.msk [vmem:[#allocation3] sm:$0xf] %vm54, 0.0
      %57 = vst.msk [vmem:[#allocation4] sm:$0xf] %vm54, 0.0
    $region13: #{varf.2} parent=1 // pred_fallthru
      _
    %v58 = vld [vmem:[#allocation2] sm:$0xf]
    %v60 = vperm.slane %v58, 0
    %v61 = vperm.slane %v58, 1
    %v62 = vperm.slane %v58, 2
    %v63 = vperm.slane %v58, 3
    %v68 = vsub.f32 %v25, %v60
    %v69 = vsub.f32 %v26, %v61
    %v70 = vsub.f32 %v27, %v62
    %v71 = vsub.f32 %v28, %v63
    %v72 = vld [vmem:[#allocation3] sm:$0xf]
    %v73 = vrot.slane %v68, 4
    %v74 = vadd.f32 %v68, %v73
    %v75 = vrot.slane %v74, 2
    %v76 = vadd.f32 %v74, %v75
    %v77 = vrot.slane %v76, 1
    %v78 = vadd.f32 %v76, %v77
    %v79 = vrot.slane %v69, 4
    %v80 = vadd.f32 %v69, %v79
    %v81 = vrot.slane %v80, 2
    %v82 = vadd.f32 %v80, %v81
    %v83 = vrot.slane %v82, 1
    %v84 = vadd.f32 %v82, %v83
    %v85 = vrot.slane %v70, 4
    %v86 = vadd.f32 %v70, %v85
    %v87 = vrot.slane %v86, 2
    %v88 = vadd.f32 %v86, %v87
    %v89 = vrot.slane %v88, 1
    %v90 = vadd.f32 %v88, %v89
    %v91 = vrot.slane %v71, 4
    %v92 = vadd.f32 %v71, %v91
    %v93 = vrot.slane %v92, 2
    %v94 = vadd.f32 %v92, %v93
    %v95 = vrot.slane %v94, 1
    %v96 = vadd.f32 %v94, %v95
    %v101 = vrot.slane %v84, 7
    %v102 = vrot.slane %v90, 6
    %v103 = vrot.slane %v96, 5
    %vm104 = vcmask 1040384
    %v105 = vsel %vm104, %v78, %v101
    %vm106 = vcmask 1042434
    %v107 = vsel %vm106, %v102, %v103
    %vm108 = vcmask 1041408
    %v109 = vsel %vm108, %v105, %v107
    %v111 = vadd.f32 %v72, %v109
    %v112 = vlaneseq
    %vm113 = vcmp.ge.s32.totalorder %v112, 0
    %vm114 = vcmp.lt.s32.totalorder %v112, 512
    %vm115 = vmand %vm113, %vm114
    %116 = vst.msk [vmem:[#allocation3] sm:$0xf] %vm115, %v111
    %v117 = vld [vmem:[#allocation4] sm:$0xf]
    %v118 = vmul.f32 %v68, %v68
    %v119 = vmul.f32 %v69, %v69
    %v120 = vmul.f32 %v70, %v70
    %v121 = vmul.f32 %v71, %v71
    %v122 = vrot.slane %v118, 4
    %v123 = vadd.f32 %v118, %v122
    %v124 = vrot.slane %v123, 2
    %v125 = vadd.f32 %v123, %v124
    %v126 = vrot.slane %v125, 1
    %v127 = vadd.f32 %v125, %v126
    %v128 = vrot.slane %v119, 4
    %v129 = vadd.f32 %v119, %v128
    %v130 = vrot.slane %v129, 2
    %v131 = vadd.f32 %v129, %v130
    %v132 = vrot.slane %v131, 1
    %v133 = vadd.f32 %v131, %v132
    %v134 = vrot.slane %v120, 4
    %v135 = vadd.f32 %v120, %v134
    %v136 = vrot.slane %v135, 2
    %v137 = vadd.f32 %v135, %v136
    %v138 = vrot.slane %v137, 1
    %v139 = vadd.f32 %v137, %v138
    %v140 = vrot.slane %v121, 4
    %v141 = vadd.f32 %v121, %v140
    %v142 = vrot.slane %v141, 2
    %v143 = vadd.f32 %v141, %v142
    %v144 = vrot.slane %v143, 1
    %v145 = vadd.f32 %v143, %v144
    %v150 = vrot.slane %v133, 7
    %v151 = vrot.slane %v139, 6
    %v152 = vrot.slane %v145, 5
    %v153 = vsel %vm104, %v127, %v150
    %v154 = vsel %vm106, %v151, %v152
    %v155 = vsel %vm108, %v153, %v154
    %v157 = vadd.f32 %v117, %v155
    %158 = vst.msk [vmem:[#allocation4] sm:$0xf] %vm115, %v157
    // Predicated region
    $region14: #{varf.2} parent=1 // pred_check
      %p159 = pneg %p33
    $region15: #{varf.2} parent=1 // pred_check_branch
      %161 = sbr.rel (%p159) target = $region17
    $region16: #{varf.2} parent=1 // pred_region
      %v162 = vld [vmem:[#allocation3] sm:$0xf]
      %v163 = vld [vmem:[#allocation4] sm:$0xf]
      %v164 = vmul.f32 %v162, %v162
      %v165 = vmul.f32 %v164, 0.125
      %v166 = vsub.f32 %v163, %v165
      %v167 = vrcp.pop 7.0
      %v168 = vmul.f32 7.0, %v167
      %v169 = vsub.f32 1.0, %v168
      %v170 = vmul.f32 %v167, %v169
      %v171 = vadd.f32 %v167, %v170
      %vm172 = vweird.f32 %v167
      %v173 = vsel %vm172, %v167, %v171
      %v174 = vmul.f32 %v166, %v173
      %v175 = vmax.f32 %v174, 0.0
      %v176 = vrsqrt.pop %v175
      %v177 = vmul.f32 %v176, %v175
      %v178 = vmul.f32 %v177, %v176
      %v179 = vmul.f32 0.5, %v178
      %v180 = vsub.f32 1.5, %v179
      %v181 = vmul.f32 %v176, %v180
      %v182 = vmul.f32 %v175, %v181
      %vm183 = vcmp.eq.f32.partialorder %v175, inf
      %v184 = vsel %vm183, %v175, %v182
      %vm185 = vcmp.eq.f32.partialorder %v175, 0.0
      %v186 = vand.u32 %v175, 2147483648
      %v187 = vsel %vm185, %v186, %v184
      %188 = vst.msk [vmem:[%s2] sm:$0xf] %vm115, %v187
    $region17: #{varf.2} parent=1 // pred_fallthru
      _
    // Predicated region
    $region18: #{varf.2} parent=1 // pred_check
      _
    $region19: #{varf.2} parent=1 // pred_check_branch
      %190 = sbr.rel (0) target = $region21
    $region20: #{varf.2} parent=1 // pred_region
      %192 = vsyncadd [#allocation7], 0
      %s194 = sshll.u32 [#allocation8], 4
      %s195 = int_to_ptr.vmem [resolvable:$true] %s194
      %s196 = sshll.u32 %s1, 4
      %s197 = int_to_ptr.hbm [resolvable:$true] %s196
      %199 = dma.vmem_to_hbm [thread:$0]  %s195, 512, %s197, [#allocation7]
    $region21: #{varf.2} parent=1 // pred_fallthru
      _
    // Predicated region
    $region22: #{varf.2} parent=1 // pred_check
      _
    $region23: #{varf.2} parent=1 // pred_check_branch
      %201 = sbr.rel (0) target = $region25
    $region24: #{varf.2} parent=1 // pred_region
      _
    $region25: #{varf.2} parent=1 // pred_fallthru
      _
    // Predicated region
    $region26: #{varf.2} parent=1 // pred_check
      _
    $region27: #{varf.2} parent=1 // pred_check_branch
      %203 = sbr.rel (0) target = $region29
    $region28: #{varf.2} parent=1 // pred_region
      %205 = dma.done [#allocation7], 512
    $region29: #{varf.2} parent=1 // pred_fallthru
      _
    // Predicated region
    $region30: #{varf.2} parent=1 // pred_check
      _
    $region31: #{varf.2} parent=1 // pred_check_branch
      %207 = sbr.rel (0) target = $region33
    $region32: #{varf.2} parent=1 // pred_region
      _
    $region33: #{varf.2} parent=1 // pred_fallthru
      _
    %208 = vsyncpa [#allocation6], 1
    %209 = vsyncpa [#allocation7], 1

</llo_original>
